<compile_context>
chip_gen: v7x
topology: tpu7x:2x2x1
jax: 0.10.0
libtpu: 0.0.40
codegen_flags: <defaults>
</compile_context>

<pallas_src>
import jax
import jax.numpy as jnp
from jax.experimental import pallas as pl
from jax.experimental.pallas import tpu as pltpu


def _swish_kernel(x_ref, o_ref):
    x = x_ref[...]
    # sigmoid: exp on the EUP slot, add/div on the VPU; multiply fused in the
    # same pass so the tile is read once and written once.
    sig = 1.0 / (1.0 + jnp.exp(-x))
    o_ref[...] = x * sig


def _round_up(a, b):
    return -(-a // b) * b


def swish(x, *, max_tile_rows=512, interpret=False):
    """y = x * sigmoid(x), same shape/dtype as x.

    PyTorch's `inplace=True` variant only changes buffer reuse, not the math,
    so both flavours map to this single function.
    """
    orig_shape = x.shape
    orig_dtype = x.dtype
    n = x.size

    # Pick the widest lane dim (multiple of 128) the input can fill at least
    # once -> lane-dense output stores; padding is dropped afterwards.
    lane = 128
    for cand in (2048, 1024, 512, 256, 128):
        if n >= cand:
            lane = cand
            break

    rows = -(-n // lane)
    tile_m = min(max_tile_rows, _round_up(rows, 8))   # sublane-aligned row tile
    padded_rows = _round_up(rows, tile_m)
    pad = padded_rows * lane - n

    flat = x.reshape(-1)
    if pad:
        flat = jnp.pad(flat, (0, pad))                # swish(0)=0; padding is discarded
    x2d = flat.reshape(padded_rows, lane)

    grid = (padded_rows // tile_m,)
    out = pl.pallas_call(
        _swish_kernel,
        out_shape=jax.ShapeDtypeStruct((padded_rows, lane), orig_dtype),
        grid=grid,
        in_specs=[pl.BlockSpec((tile_m, lane), lambda i: (i, 0))],
        out_specs=pl.BlockSpec((tile_m, lane), lambda i: (i, 0)),
        compiler_params=pltpu.CompilerParams(
            dimension_semantics=("parallel",)),
        interpret=interpret,
    )(x2d)

    return out.reshape(-1)[:n].reshape(orig_shape)


if __name__ == "__main__":
    # TODO(synk): `inplace=True` is an in-place mutation flag in PyTorch; JAX
    # arrays are immutable, so both code paths return the identical value.
    N, C, H, W = 2, 4, 16, 16
    x = jax.random.normal(jax.random.PRNGKey(0), (N, C, H, W), jnp.float32)

    run = jax.jit(swish)
    y = run(x)
    jax.block_until_ready(y)

    ref = x * jax.nn.sigmoid(x)
    assert y.shape == x.shape and y.dtype == x.dtype
    assert bool(jnp.all(jnp.isfinite(y)))
    assert bool(jnp.allclose(y, ref, atol=1e-6, rtol=1e-6))
    print("KERNEL_OK")
</pallas_src>

<mosaic_0001>
module attributes {stable_mosaic.version = 11 : i64} {
  func.func @_swish_kernel(%arg0: i32, %arg1: memref<8x2048xf32, #tpu.memory_space<vmem>>, %arg2: memref<8x2048xf32, #tpu.memory_space<vmem>>) attributes {dimension_semantics = [#tpu.dimension_semantics<parallel>], iteration_bounds = array<i64: 1>, scalar_prefetch = 0 : i64, scratch_operands = 0 : i64, tpu.core_type = #tpu.core_type<tc>, window_params = [{transform_indices = @transform_0, window_bounds = array<i64: 8, 2048>}, {transform_indices = @transform_1, window_bounds = array<i64: 8, 2048>}]} {
    %c0 = arith.constant 0 : index
    %c0_0 = arith.constant 0 : index
    %0 = vector.load %arg1[%c0, %c0_0] : memref<8x2048xf32, #tpu.memory_space<vmem>>, vector<8x2048xf32>
    %cst = arith.constant 0.000000e+00 : f32
    %1 = vector.broadcast %cst : f32 to vector<8x2048xf32>
    %2 = arith.subf %1, %0 : vector<8x2048xf32>
    %3 = math.exp %2 : vector<8x2048xf32>
    %cst_1 = arith.constant 1.000000e+00 : f32
    %4 = vector.broadcast %cst_1 : f32 to vector<8x2048xf32>
    %5 = arith.addf %4, %3 : vector<8x2048xf32>
    %cst_2 = arith.constant 1.000000e+00 : f32
    %6 = vector.broadcast %cst_2 : f32 to vector<8x2048xf32>
    %7 = arith.divf %6, %5 : vector<8x2048xf32>
    %8 = arith.mulf %0, %7 : vector<8x2048xf32>
    %c0_3 = arith.constant 0 : index
    %c0_4 = arith.constant 0 : index
    %9 = vector.load %arg2[%c0_3, %c0_4] : memref<8x2048xf32, #tpu.memory_space<vmem>>, vector<8x2048xf32>
    tpu.vector_store %arg2[%c0_3, %c0_4], %8 {strides = array<i32>} : memref<8x2048xf32, #tpu.memory_space<vmem>>, vector<8x2048xf32>,
    return
  }
  func.func @transform_0(%arg0: i32) -> (i32, i32) {
    %c0_i32 = arith.constant 0 : i32
    %c0_i32_0 = arith.constant 0 : i32
    return %arg0, %c0_i32 : i32, i32
  }
  func.func @transform_1(%arg0: i32) -> (i32, i32) {
    %c0_i32 = arith.constant 0 : i32
    %c0_i32_0 = arith.constant 0 : i32
    return %arg0, %c0_i32 : i32, i32
  }
}

</mosaic_0001>

<llo_original>
// kernel: swish.1
$region0: #{swish.1}
  #allocation0 [shape = 'u32[]', space=smem, size = 0x4, offset = 0x4, fixed_abs, tag = 'smem constant byte address 0x4 - core index']
  #allocation1 [shape = 'u32[144,128]{1,0:T(1,128)}', space=vmem, size = 0x12000, scoped, tag = 'internal scratch']
  %s0 = inlined_call_operand.vmem [shape: f32[8,2048], index: 0, kind: input, shape index: {}]
  %s1 = inlined_call_operand.vmem [shape: f32[8,2048], index: 1, kind: output, shape index: {}]
  %s2 = sld [smem:[#allocation0]]
  $region14: #{swish.1} parent=0
    _
  %s4 = ssub.s32 1, %s2
  %s5 = scalar_select 0, %s4, %s2
  // Predicated region
  $region2: #{swish.1} parent=0 // pred_check
    _
  $region3: #{swish.1} parent=0 // pred_check_branch
    %7 = sbr.rel (0) target = $region5
  $region4: #{swish.1} parent=0 // pred_region
    _
  $region5: #{swish.1} parent=0 // pred_fallthru
    _
  %v8 = vld [vmem:[%s0] sm:$0xff]
  %v9 = vld [vmem:[%s0 + $0x8] sm:$0xff]
  %v10 = vld [vmem:[%s0 + $0x10] sm:$0xff]
  %v11 = vld [vmem:[%s0 + $0x18] sm:$0xff]
  %v12 = vld [vmem:[%s0 + $0x20] sm:$0xff]
  %v13 = vld [vmem:[%s0 + $0x28] sm:$0xff]
  %v14 = vld [vmem:[%s0 + $0x30] sm:$0xff]
  %v15 = vld [vmem:[%s0 + $0x38] sm:$0xff]
  %v16 = vld [vmem:[%s0 + $0x40] sm:$0xff]
  %v17 = vld [vmem:[%s0 + $0x48] sm:$0xff]
  %v18 = vld [vmem:[%s0 + $0x50] sm:$0xff]
  %v19 = vld [vmem:[%s0 + $0x58] sm:$0xff]
  %v20 = vld [vmem:[%s0 + $0x60] sm:$0xff]
  %v21 = vld [vmem:[%s0 + $0x68] sm:$0xff]
  %v22 = vld [vmem:[%s0 + $0x70] sm:$0xff]
  %v23 = vld [vmem:[%s0 + $0x78] sm:$0xff]
  %v24 = vsub.f32 0.0, %v8
  %v25 = vsub.f32 0.0, %v9
  %v26 = vsub.f32 0.0, %v10
  %v27 = vsub.f32 0.0, %v11
  %v28 = vsub.f32 0.0, %v12
  %v29 = vsub.f32 0.0, %v13
  %v30 = vsub.f32 0.0, %v14
  %v31 = vsub.f32 0.0, %v15
  %v32 = vsub.f32 0.0, %v16
  %v33 = vsub.f32 0.0, %v17
  %v34 = vsub.f32 0.0, %v18
  %v35 = vsub.f32 0.0, %v19
  %v36 = vsub.f32 0.0, %v20
  %v37 = vsub.f32 0.0, %v21
  %v38 = vsub.f32 0.0, %v22
  %v39 = vsub.f32 0.0, %v23
  %v40 = vmul.f32 %v24, 1.442695
  %v41 = vpow.pop %v40
  %v42 = vmul.f32 %v25, 1.442695
  %v43 = vpow.pop %v42
  %v44 = vmul.f32 %v26, 1.442695
  %v45 = vpow.pop %v44
  %v46 = vmul.f32 %v27, 1.442695
  %v47 = vpow.pop %v46
  %v48 = vmul.f32 %v28, 1.442695
  %v49 = vpow.pop %v48
  %v50 = vmul.f32 %v29, 1.442695
  %v51 = vpow.pop %v50
  %v52 = vmul.f32 %v30, 1.442695
  %v53 = vpow.pop %v52
  %v54 = vmul.f32 %v31, 1.442695
  %v55 = vpow.pop %v54
  %v56 = vmul.f32 %v32, 1.442695
  %v57 = vpow.pop %v56
  %v58 = vmul.f32 %v33, 1.442695
  %v59 = vpow.pop %v58
  %v60 = vmul.f32 %v34, 1.442695
  %v61 = vpow.pop %v60
  %v62 = vmul.f32 %v35, 1.442695
  %v63 = vpow.pop %v62
  %v64 = vmul.f32 %v36, 1.442695
  %v65 = vpow.pop %v64
  %v66 = vmul.f32 %v37, 1.442695
  %v67 = vpow.pop %v66
  %v68 = vmul.f32 %v38, 1.442695
  %v69 = vpow.pop %v68
  %v70 = vmul.f32 %v39, 1.442695
  %v71 = vpow.pop %v70
  %v72 = vadd.f32 %v41, 1.0
  %v73 = vadd.f32 %v43, 1.0
  %v74 = vadd.f32 %v45, 1.0
  %v75 = vadd.f32 %v47, 1.0
  %v76 = vadd.f32 %v49, 1.0
  %v77 = vadd.f32 %v51, 1.0
  %v78 = vadd.f32 %v53, 1.0
  %v79 = vadd.f32 %v55, 1.0
  %v80 = vadd.f32 %v57, 1.0
  %v81 = vadd.f32 %v59, 1.0
  %v82 = vadd.f32 %v61, 1.0
  %v83 = vadd.f32 %v63, 1.0
  %v84 = vadd.f32 %v65, 1.0
  %v85 = vadd.f32 %v67, 1.0
  %v86 = vadd.f32 %v69, 1.0
  %v87 = vadd.f32 %v71, 1.0
  %v88 = vrcp.pop %v72
  %v89 = vmul.f32 1.0, %v88
  %v90 = vrcp.pop %v73
  %v91 = vmul.f32 1.0, %v90
  %v92 = vrcp.pop %v74
  %v93 = vmul.f32 1.0, %v92
  %v94 = vrcp.pop %v75
  %v95 = vmul.f32 1.0, %v94
  %v96 = vrcp.pop %v76
  %v97 = vmul.f32 1.0, %v96
  %v98 = vrcp.pop %v77
  %v99 = vmul.f32 1.0, %v98
  %v100 = vrcp.pop %v78
  %v101 = vmul.f32 1.0, %v100
  %v102 = vrcp.pop %v79
  %v103 = vmul.f32 1.0, %v102
  %v104 = vrcp.pop %v80
  %v105 = vmul.f32 1.0, %v104
  %v106 = vrcp.pop %v81
  %v107 = vmul.f32 1.0, %v106
  %v108 = vrcp.pop %v82
  %v109 = vmul.f32 1.0, %v108
  %v110 = vrcp.pop %v83
  %v111 = vmul.f32 1.0, %v110
  %v112 = vrcp.pop %v84
  %v113 = vmul.f32 1.0, %v112
  %v114 = vrcp.pop %v85
  %v115 = vmul.f32 1.0, %v114
  %v116 = vrcp.pop %v86
  %v117 = vmul.f32 1.0, %v116
  %v118 = vrcp.pop %v87
  %v119 = vmul.f32 1.0, %v118
  %v120 = vmul.f32 %v8, %v89
  %v121 = vmul.f32 %v9, %v91
  %v122 = vmul.f32 %v10, %v93
  %v123 = vmul.f32 %v11, %v95
  %v124 = vmul.f32 %v12, %v97
  %v125 = vmul.f32 %v13, %v99
  %v126 = vmul.f32 %v14, %v101
  %v127 = vmul.f32 %v15, %v103
  %v128 = vmul.f32 %v16, %v105
  %v129 = vmul.f32 %v17, %v107
  %v130 = vmul.f32 %v18, %v109
  %v131 = vmul.f32 %v19, %v111
  %v132 = vmul.f32 %v20, %v113
  %v133 = vmul.f32 %v21, %v115
  %v134 = vmul.f32 %v22, %v117
  %v135 = vmul.f32 %v23, %v119
  %136 = vst [vmem:[%s1] sm:$0xff] %v120
  %137 = vst [vmem:[%s1 + $0x8] sm:$0xff] %v121
  %138 = vst [vmem:[%s1 + $0x10] sm:$0xff] %v122
  %139 = vst [vmem:[%s1 + $0x18] sm:$0xff] %v123
  %140 = vst [vmem:[%s1 + $0x20] sm:$0xff] %v124
  %141 = vst [vmem:[%s1 + $0x28] sm:$0xff] %v125
  %142 = vst [vmem:[%s1 + $0x30] sm:$0xff] %v126
  %143 = vst [vmem:[%s1 + $0x38] sm:$0xff] %v127
  %144 = vst [vmem:[%s1 + $0x40] sm:$0xff] %v128
  %145 = vst [vmem:[%s1 + $0x48] sm:$0xff] %v129
  %146 = vst [vmem:[%s1 + $0x50] sm:$0xff] %v130
  %147 = vst [vmem:[%s1 + $0x58] sm:$0xff] %v131
  %148 = vst [vmem:[%s1 + $0x60] sm:$0xff] %v132
  %149 = vst [vmem:[%s1 + $0x68] sm:$0xff] %v133
  %150 = vst [vmem:[%s1 + $0x70] sm:$0xff] %v134
  %151 = vst [vmem:[%s1 + $0x78] sm:$0xff] %v135
  // Predicated region
  $region6: #{swish.1} parent=0 // pred_check
    _
  $region7: #{swish.1} parent=0 // pred_check_branch
    %153 = sbr.rel (0) target = $region9
  $region8: #{swish.1} parent=0 // pred_region
    _
  $region9: #{swish.1} parent=0 // pred_fallthru
    _
  // Predicated region
  $region10: #{swish.1} parent=0 // pred_check
    _
  $region11: #{swish.1} parent=0 // pred_check_branch
    %155 = sbr.rel (0) target = $region13
  $region12: #{swish.1} parent=0 // pred_region
    _
  $region13: #{swish.1} parent=0 // pred_fallthru
    _

</llo_original>
